<compile_context>
chip_gen: v5e
topology: v5e:2x2
jax: 0.10.0
libtpu: 0.0.40
codegen_flags: <defaults>
</compile_context>

<pallas_src>
import functools

import jax
import jax.numpy as jnp
from jax.experimental import pallas as pl
from jax.experimental.pallas import tpu as pltpu


def _round_up(n, m):
    return ((n + m - 1) // m) * m


def mlp_kernel(x_ref, w1_ref, b1_ref, w2_ref, b2_ref, w3_ref, b3_ref, o_ref):
    # fc1 + relu : MXU accumulates in f32, bias/relu on the VPU in f32.
    h1 = jnp.dot(x_ref[...], w1_ref[...], preferred_element_type=jnp.float32)
    h1 = jnp.maximum(h1 + b1_ref[...], 0.0)
    # fc2 + relu
    h2 = jnp.dot(h1.astype(w2_ref.dtype), w2_ref[...],
                 preferred_element_type=jnp.float32)
    h2 = jnp.maximum(h2 + b2_ref[...], 0.0)
    # fc3 (no activation) — narrow (tile_b, 3) store; masked vst, but the HBM bytes
    # saved vastly outweigh the masked-store cost for this mem-bound kernel.
    out = jnp.dot(h2.astype(w3_ref.dtype), w3_ref[...],
                  preferred_element_type=jnp.float32)
    o_ref[...] = (out + b3_ref[...]).astype(o_ref.dtype)


@functools.partial(jax.jit, static_argnames=("tile_b", "use_bf16"))
def simple_rotation_predictor(x, w1, b1, w2, b2, w3, b3, *, tile_b=8192,
                              use_bf16=False):
    """Forward pass of the 3-layer MLP; returns (B, 3) float32."""
    B, F = x.shape
    H1, H2, OUT = w1.shape[1], w2.shape[1], w3.shape[1]

    compute_dtype = jnp.bfloat16 if use_bf16 else jnp.float32
    row_align = 16 if use_bf16 else 8  # sublane tile for the streamed dtype

    # Batch tile: big enough to amortize per-grid-step overhead, but capped at
    # ~B/2 (rounded to the sublane tile) so the grid keeps >= 2 steps when the
    # batch allows it (keeps both TensorCores busy on v7x).
    tile_b = max(row_align,
                 min(tile_b, _round_up(max(1, B // 2), row_align)))
    Bp = _round_up(B, tile_b)
    num_tiles = Bp // tile_b
    grid = (num_tiles,)

    # Only the batch rows get padded; feature (16), hidden (64/32) and output (3)
    # dims stay at their native sizes (full-extent blocks are legal).
    xp = x.astype(compute_dtype)
    if Bp != B:
        xp = jnp.zeros((Bp, F), compute_dtype).at[:B, :].set(xp)

    w1c = w1.astype(compute_dtype)
    w2c = w2.astype(compute_dtype)
    w3c = w3.astype(compute_dtype)
    b1c = b1.reshape(1, H1).astype(jnp.float32)
    b2c = b2.reshape(1, H2).astype(jnp.float32)
    b3c = b3.reshape(1, OUT).astype(jnp.float32)

    itemsize = jnp.dtype(compute_dtype).itemsize
    cost = pl.CostEstimate(
        flops=2 * B * (F * H1 + H1 * H2 + H2 * OUT),
        transcendentals=0,
        bytes_accessed=(B * F * itemsize                       # x in
                        + B * OUT * 4                          # out (f32)
                        + (F * H1 + H1 * H2 + H2 * OUT) * itemsize
                        + (H1 + H2 + OUT) * 4),                # biases
    )

    # x streams over the batch grid (deeper buffering when the grid is long enough);
    # out streams likewise; weights/biases are VMEM-resident (constant block index).
    if num_tiles >= 3:
        x_spec = pl.BlockSpec((tile_b, F), lambda i: (i, 0),
                              pipeline_mode=pl.Buffered(3))
    else:
        x_spec = pl.BlockSpec((tile_b, F), lambda i: (i, 0))
    out_spec = pl.BlockSpec((tile_b, OUT), lambda i: (i, 0))
    w1_spec = pl.BlockSpec((F, H1), lambda i: (0, 0))
    b1_spec = pl.BlockSpec((1, H1), lambda i: (0, 0))
    w2_spec = pl.BlockSpec((H1, H2), lambda i: (0, 0))
    b2_spec = pl.BlockSpec((1, H2), lambda i: (0, 0))
    w3_spec = pl.BlockSpec((H2, OUT), lambda i: (0, 0))
    b3_spec = pl.BlockSpec((1, OUT), lambda i: (0, 0))

    out_padded = pl.pallas_call(
        mlp_kernel,
        out_shape=jax.ShapeDtypeStruct((Bp, OUT), jnp.float32),
        grid=grid,
        in_specs=[x_spec, w1_spec, b1_spec, w2_spec, b2_spec, w3_spec, b3_spec],
        out_specs=out_spec,
        compiler_params=pltpu.CompilerParams(
            dimension_semantics=("parallel",),
            vmem_limit_bytes=32 * 1024 * 1024),
        cost_estimate=cost,
    )(xp, w1c, b1c, w2c, b2c, w3c, b3c)

    # Drop padded batch rows only (no column slice needed — output is already (., 3)).
    return out_padded[:B] if Bp != B else out_padded


def init_params(key, input_size):
    # Deterministic synthetic init (uniform, roughly matching nn.Linear scale).
    # Weights stored (in_features, out_features) so the kernel computes x @ W + b.
    k1, k2, k3, k4, k5, k6 = jax.random.split(key, 6)

    def lin(kw, kb, fan_in, fan_out):
        bound = 1.0 / (fan_in ** 0.5)
        w = jax.random.uniform(kw, (fan_in, fan_out), jnp.float32, -bound, bound)
        b = jax.random.uniform(kb, (1, fan_out), jnp.float32, -bound, bound)
        return w, b

    w1, b1 = lin(k1, k2, input_size, 64)
    w2, b2 = lin(k3, k4, 64, 32)
    w3, b3 = lin(k5, k6, 32, 3)
    return w1, b1, w2, b2, w3, b3


if __name__ == "__main__":
    key = jax.random.PRNGKey(0)
    kx, kp = jax.random.split(key)

    batch = 8
    input_size = 16  # data.shape[1] after dropping the last 3 columns (synthetic choice)

    x = jax.random.normal(kx, (batch, input_size), jnp.float32)
    w1, b1, w2, b2, w3, b3 = init_params(kp, input_size)

    # f32 path — tight check against a plain-JAX reference.
    out = jax.block_until_ready(
        simple_rotation_predictor(x, w1, b1, w2, b2, w3, b3))
    ref = jnp.maximum(x @ w1 + b1, 0.0)
    ref = jnp.maximum(ref @ w2 + b2, 0.0)
    ref = ref @ w3 + b3
    assert out.shape == (batch, 3)
    assert jnp.allclose(out, ref, atol=1e-4, rtol=1e-4)

    # bf16 streaming path (halves x HBM traffic; f32 accumulation) — looser tolerance.
    out_bf16 = jax.block_until_ready(
        simple_rotation_predictor(x, w1, b1, w2, b2, w3, b3, use_bf16=True))
    assert out_bf16.shape == (batch, 3)
    assert jnp.allclose(out_bf16, ref, atol=5e-2, rtol=5e-2)

    print("KERNEL_OK")
</pallas_src>

<mosaic_0001>
module attributes {stable_mosaic.version = 11 : i64} {
  func.func @mlp_kernel(%arg0: i32, %arg1: memref<8x16xf32, #tpu.memory_space<vmem>>, %arg2: memref<16x64xf32, #tpu.memory_space<vmem>>, %arg3: memref<1x64xf32, #tpu.memory_space<vmem>>, %arg4: memref<64x32xf32, #tpu.memory_space<vmem>>, %arg5: memref<1x32xf32, #tpu.memory_space<vmem>>, %arg6: memref<32x3xf32, #tpu.memory_space<vmem>>, %arg7: memref<1x3xf32, #tpu.memory_space<vmem>>, %arg8: memref<8x3xf32, #tpu.memory_space<vmem>>) attributes {dimension_semantics = [#tpu.dimension_semantics<parallel>], iteration_bounds = array<i64: 1>, scalar_prefetch = 0 : i64, scratch_operands = 0 : i64, tpu.core_type = #tpu.core_type<tc>, window_params = [{transform_indices = @transform_0, window_bounds = array<i64: 8, 16>}, {pipeline_mode = #tpu.pipeline_mode<synchronous>, transform_indices = @transform_1, window_bounds = array<i64: 16, 64>}, {pipeline_mode = #tpu.pipeline_mode<synchronous>, transform_indices = @transform_2, window_bounds = array<i64: 1, 64>}, {pipeline_mode = #tpu.pipeline_mode<synchronous>, transform_indices = @transform_3, window_bounds = array<i64: 64, 32>}, {pipeline_mode = #tpu.pipeline_mode<synchronous>, transform_indices = @transform_4, window_bounds = array<i64: 1, 32>}, {pipeline_mode = #tpu.pipeline_mode<synchronous>, transform_indices = @transform_5, window_bounds = array<i64: 32, 3>}, {pipeline_mode = #tpu.pipeline_mode<synchronous>, transform_indices = @transform_6, window_bounds = array<i64: 1, 3>}, {transform_indices = @transform_7, window_bounds = array<i64: 8, 3>}]} {
    %c0 = arith.constant 0 : index
    %c0_0 = arith.constant 0 : index
    %0 = vector.load %arg1[%c0, %c0_0] : memref<8x16xf32, #tpu.memory_space<vmem>>, vector<8x16xf32>
    %c0_1 = arith.constant 0 : index
    %c0_2 = arith.constant 0 : index
    %1 = vector.load %arg2[%c0_1, %c0_2] : memref<16x64xf32, #tpu.memory_space<vmem>>, vector<16x64xf32>
    %cst = arith.constant dense<0.000000e+00> : vector<8x64xf32>
    %2 = tpu.matmul %0, %1, %cst {dimension_numbers = #tpu.dot_dimension_numbers<[1], [0], [0], [1], [0, 0, 1, 1], [], []>} : vector<8x16xf32>, vector<16x64xf32>, vector<8x64xf32> -> vector<8x64xf32>
    %c0_3 = arith.constant 0 : index
    %c0_4 = arith.constant 0 : index
    %3 = vector.load %arg3[%c0_3, %c0_4] : memref<1x64xf32, #tpu.memory_space<vmem>>, vector<1x64xf32>
    %4 = vector.broadcast %3 : vector<1x64xf32> to vector<8x64xf32>
    %5 = arith.addf %2, %4 : vector<8x64xf32>
    %cst_5 = arith.constant 0.000000e+00 : f32
    %6 = vector.broadcast %cst_5 : f32 to vector<8x64xf32>
    %7 = arith.maximumf %5, %6 : vector<8x64xf32>
    %c0_6 = arith.constant 0 : index
    %c0_7 = arith.constant 0 : index
    %8 = vector.load %arg4[%c0_6, %c0_7] : memref<64x32xf32, #tpu.memory_space<vmem>>, vector<64x32xf32>
    %cst_8 = arith.constant dense<0.000000e+00> : vector<8x32xf32>
    %9 = tpu.matmul %7, %8, %cst_8 {dimension_numbers = #tpu.dot_dimension_numbers<[1], [0], [0], [1], [0, 0, 1, 1], [], []>} : vector<8x64xf32>, vector<64x32xf32>, vector<8x32xf32> -> vector<8x32xf32>
    %c0_9 = arith.constant 0 : index
    %c0_10 = arith.constant 0 : index
    %10 = vector.load %arg5[%c0_9, %c0_10] : memref<1x32xf32, #tpu.memory_space<vmem>>, vector<1x32xf32>
    %11 = vector.broadcast %10 : vector<1x32xf32> to vector<8x32xf32>
    %12 = arith.addf %9, %11 : vector<8x32xf32>
    %cst_11 = arith.constant 0.000000e+00 : f32
    %13 = vector.broadcast %cst_11 : f32 to vector<8x32xf32>
    %14 = arith.maximumf %12, %13 : vector<8x32xf32>
    %c0_12 = arith.constant 0 : index
    %c0_13 = arith.constant 0 : index
    %15 = vector.load %arg6[%c0_12, %c0_13] : memref<32x3xf32, #tpu.memory_space<vmem>>, vector<32x3xf32>
    %cst_14 = arith.constant dense<0.000000e+00> : vector<8x3xf32>
    %16 = tpu.matmul %14, %15, %cst_14 {dimension_numbers = #tpu.dot_dimension_numbers<[1], [0], [0], [1], [0, 0, 1, 1], [], []>} : vector<8x32xf32>, vector<32x3xf32>, vector<8x3xf32> -> vector<8x3xf32>
    %c0_15 = arith.constant 0 : index
    %c0_16 = arith.constant 0 : index
    %17 = vector.load %arg7[%c0_15, %c0_16] : memref<1x3xf32, #tpu.memory_space<vmem>>, vector<1x3xf32>
    %18 = vector.broadcast %17 : vector<1x3xf32> to vector<8x3xf32>
    %19 = arith.addf %16, %18 : vector<8x3xf32>
    %c0_17 = arith.constant 0 : index
    %c0_18 = arith.constant 0 : index
    %20 = vector.load %arg8[%c0_17, %c0_18] : memref<8x3xf32, #tpu.memory_space<vmem>>, vector<8x3xf32>
    tpu.vector_store %arg8[%c0_17, %c0_18], %19 {strides = array<i32>} : memref<8x3xf32, #tpu.memory_space<vmem>>, vector<8x3xf32>,
    return
  }
  func.func @transform_0(%arg0: i32) -> (i32, i32) {
    %c0_i32 = arith.constant 0 : i32
    %c0_i32_0 = arith.constant 0 : i32
    return %arg0, %c0_i32 : i32, i32
  }
  func.func @transform_1(%arg0: i32) -> (i32, i32) {
    %c0_i32 = arith.constant 0 : i32
    %c0_i32_0 = arith.constant 0 : i32
    %c0_i32_1 = arith.constant 0 : i32
    return %c0_i32, %c0_i32_0 : i32, i32
  }
  func.func @transform_2(%arg0: i32) -> (i32, i32) {
    %c0_i32 = arith.constant 0 : i32
    %c0_i32_0 = arith.constant 0 : i32
    %c0_i32_1 = arith.constant 0 : i32
    return %c0_i32, %c0_i32_0 : i32, i32
  }
  func.func @transform_3(%arg0: i32) -> (i32, i32) {
    %c0_i32 = arith.constant 0 : i32
    %c0_i32_0 = arith.constant 0 : i32
    %c0_i32_1 = arith.constant 0 : i32
    return %c0_i32, %c0_i32_0 : i32, i32
  }
  func.func @transform_4(%arg0: i32) -> (i32, i32) {
    %c0_i32 = arith.constant 0 : i32
    %c0_i32_0 = arith.constant 0 : i32
    %c0_i32_1 = arith.constant 0 : i32
    return %c0_i32, %c0_i32_0 : i32, i32
  }
  func.func @transform_5(%arg0: i32) -> (i32, i32) {
    %c0_i32 = arith.constant 0 : i32
    %c0_i32_0 = arith.constant 0 : i32
    %c0_i32_1 = arith.constant 0 : i32
    return %c0_i32, %c0_i32_0 : i32, i32
  }
  func.func @transform_6(%arg0: i32) -> (i32, i32) {
    %c0_i32 = arith.constant 0 : i32
    %c0_i32_0 = arith.constant 0 : i32
    %c0_i32_1 = arith.constant 0 : i32
    return %c0_i32, %c0_i32_0 : i32, i32
  }
  func.func @transform_7(%arg0: i32) -> (i32, i32) {
    %c0_i32 = arith.constant 0 : i32
    %c0_i32_0 = arith.constant 0 : i32
    return %arg0, %c0_i32 : i32, i32
  }
}

</mosaic_0001>

<llo_original>
// kernel: simple_rotation_predictor.1
$region0: #{simple_rotation_predictor.1}
  #allocation0 [shape = 'u32[]', space=smem, size = 0x4, offset = 0x4, fixed_abs, tag = 'smem constant byte address 0x4 - core index']
  #allocation1 [shape = 'u32[72,128]{1,0:T(1,128)}', space=vmem, size = 0x9000, scoped, tag = 'internal scratch']
  %s0 = inlined_call_operand.vmem [shape: f32[8,16], index: 0, kind: input, shape index: {}]
  %s1 = inlined_call_operand.vmem [shape: f32[16,64], index: 1, kind: input, shape index: {}]
  %s2 = inlined_call_operand.vmem [shape: f32[1,64], index: 2, kind: input, shape index: {}]
  %s3 = inlined_call_operand.vmem [shape: f32[64,32], index: 3, kind: input, shape index: {}]
  %s4 = inlined_call_operand.vmem [shape: f32[1,32], index: 4, kind: input, shape index: {}]
  %s5 = inlined_call_operand.vmem [shape: f32[32,3], index: 5, kind: input, shape index: {}]
  %s6 = inlined_call_operand.vmem [shape: f32[1,3], index: 6, kind: input, shape index: {}]
  %s7 = inlined_call_operand.vmem [shape: f32[8,3], index: 7, kind: output, shape index: {}]
  %s8 = sld [smem:[#allocation0]]
  $region38: #{simple_rotation_predictor.1} parent=0
    _
  %s10 = ssub.s32 1, %s8
  %s11 = scalar_select 0, %s10, %s8
  // Predicated region
  $region2: #{simple_rotation_predictor.1} parent=0 // pred_check
    _
  $region3: #{simple_rotation_predictor.1} parent=0 // pred_check_branch
    %13 = sbr.rel (0) target = $region5
  $region4: #{simple_rotation_predictor.1} parent=0 // pred_region
    _
  $region5: #{simple_rotation_predictor.1} parent=0 // pred_fallthru
    _
  // Predicated region
  $region6: #{simple_rotation_predictor.1} parent=0 // pred_check
    _
  $region7: #{simple_rotation_predictor.1} parent=0 // pred_check_branch
    %15 = sbr.rel (0) target = $region9
  $region8: #{simple_rotation_predictor.1} parent=0 // pred_region
    _
  $region9: #{simple_rotation_predictor.1} parent=0 // pred_fallthru
    _
  // Predicated region
  $region10: #{simple_rotation_predictor.1} parent=0 // pred_check
    _
  $region11: #{simple_rotation_predictor.1} parent=0 // pred_check_branch
    %17 = sbr.rel (0) target = $region13
  $region12: #{simple_rotation_predictor.1} parent=0 // pred_region
    _
  $region13: #{simple_rotation_predictor.1} parent=0 // pred_fallthru
    _
  // Predicated region
  $region14: #{simple_rotation_predictor.1} parent=0 // pred_check
    _
  $region15: #{simple_rotation_predictor.1} parent=0 // pred_check_branch
    %19 = sbr.rel (0) target = $region17
  $region16: #{simple_rotation_predictor.1} parent=0 // pred_region
    _
  $region17: #{simple_rotation_predictor.1} parent=0 // pred_fallthru
    _
  // Predicated region
  $region18: #{simple_rotation_predictor.1} parent=0 // pred_check
    _
  $region19: #{simple_rotation_predictor.1} parent=0 // pred_check_branch
    %21 = sbr.rel (0) target = $region21
  $region20: #{simple_rotation_predictor.1} parent=0 // pred_region
    _
  $region21: #{simple_rotation_predictor.1} parent=0 // pred_fallthru
    _
  // Predicated region
  $region22: #{simple_rotation_predictor.1} parent=0 // pred_check
    _
  $region23: #{simple_rotation_predictor.1} parent=0 // pred_check_branch
    %23 = sbr.rel (0) target = $region25
  $region24: #{simple_rotation_predictor.1} parent=0 // pred_region
    _
  $region25: #{simple_rotation_predictor.1} parent=0 // pred_fallthru
    _
  // Predicated region
  $region26: #{simple_rotation_predictor.1} parent=0 // pred_check
    _
  $region27: #{simple_rotation_predictor.1} parent=0 // pred_check_branch
    %25 = sbr.rel (0) target = $region29
  $region28: #{simple_rotation_predictor.1} parent=0 // pred_region
    _
  $region29: #{simple_rotation_predictor.1} parent=0 // pred_fallthru
    _
  %v26 = vld [vmem:[%s0] sm:$0xff]
  %v27 = vld [vmem:[%s1] sm:$0xff]
  %v28 = vld [vmem:[%s1 + $0x8] sm:$0xff]
  %v29 = vld [vmem:[%s2] sm:$0x1]
  %v31 = vperm.slane %v29, 0
  %vm33 = vcmask 130048
  %v35 = vsel %vm33, %v26, 0
  %37 = vmatpush.msra.mxu0 0.0
  %38 = vmatpush.msra.mxu0 0.0
  %39 = vmatpush.msra.mxu0 0.0
  %40 = vmatpush.msra.mxu0 0.0
  %41 = vmatpush.msra.mxu0 0.0
  %42 = vmatpush.msra.mxu0 0.0
  %43 = vmatpush.msra.mxu0 0.0
  %44 = vmatpush.msra.mxu0 0.0
  %45 = vmatpush.msra.mxu0 0.0
  %46 = vmatpush.msra.mxu0 0.0
  %47 = vmatpush.msra.mxu0 0.0
  %48 = vmatpush.msra.mxu0 0.0
  %49 = vmatpush.msra.mxu0 0.0
  %50 = vmatpush.msra.mxu0 0.0
  %51 = vmatpush.msra.mxu0 %v28
  %52 = vmatpush.msra.mxu0 %v27
  %53 = vmatmul.f32.gmra.mxu0 %v35
  %v54 = vpop.f32.mrf.mxu0
  %v55 = vadd.f32 %v31, %v54
  %56 = vdwg.mxu0
  %v57 = vmax.f32 %v55, 0.0
  %v58 = vld [vmem:[%s3] sm:$0xff]
  %v59 = vld [vmem:[%s3 + $0x8] sm:$0xff]
  %v60 = vld [vmem:[%s3 + $0x10] sm:$0xff]
  %v61 = vld [vmem:[%s3 + $0x18] sm:$0xff]
  %v62 = vld [vmem:[%s3 + $0x20] sm:$0xff]
  %v63 = vld [vmem:[%s3 + $0x28] sm:$0xff]
  %v64 = vld [vmem:[%s3 + $0x30] sm:$0xff]
  %v65 = vld [vmem:[%s3 + $0x38] sm:$0xff]
  %v66 = vld [vmem:[%s4] sm:$0x1]
  %v68 = vperm.slane %v66, 0
  %vm70 = vcmask 523264
  %v72 = vsel %vm70, %v57, 0
  %74 = vmatpush.msra.mxu0 0.0
  %75 = vmatpush.msra.mxu0 0.0
  %76 = vmatpush.msra.mxu0 0.0
  %77 = vmatpush.msra.mxu0 0.0
  %78 = vmatpush.msra.mxu0 0.0
  %79 = vmatpush.msra.mxu0 0.0
  %80 = vmatpush.msra.mxu0 0.0
  %81 = vmatpush.msra.mxu0 0.0
  %82 = vmatpush.msra.mxu0 %v65
  %83 = vmatpush.msra.mxu0 %v64
  %84 = vmatpush.msra.mxu0 %v63
  %85 = vmatpush.msra.mxu0 %v62
  %86 = vmatpush.msra.mxu0 %v61
  %87 = vmatpush.msra.mxu0 %v60
  %88 = vmatpush.msra.mxu0 %v59
  %89 = vmatpush.msra.mxu0 %v58
  %90 = vmatmul.f32.gmra.mxu0 %v72
  %v91 = vpop.f32.mrf.mxu0
  %v92 = vadd.f32 %v68, %v91
  %93 = vdwg.mxu0
  %v94 = vmax.f32 %v92, 0.0
  %v95 = vld [vmem:[%s5] sm:$0xff]
  %v96 = vld [vmem:[%s5 + $0x8] sm:$0xff]
  %v97 = vld [vmem:[%s5 + $0x10] sm:$0xff]
  %v98 = vld [vmem:[%s5 + $0x18] sm:$0xff]
  %v99 = vld [vmem:[%s6] sm:$0x1]
  %v101 = vperm.slane %v99, 0
  %vm103 = vcmask 261120
  %v105 = vsel %vm103, %v94, 0
  %107 = vmatpush.msra.mxu0 0.0
  %108 = vmatpush.msra.mxu0 0.0
  %109 = vmatpush.msra.mxu0 0.0
  %110 = vmatpush.msra.mxu0 0.0
  %111 = vmatpush.msra.mxu0 0.0
  %112 = vmatpush.msra.mxu0 0.0
  %113 = vmatpush.msra.mxu0 0.0
  %114 = vmatpush.msra.mxu0 0.0
  %115 = vmatpush.msra.mxu0 0.0
  %116 = vmatpush.msra.mxu0 0.0
  %117 = vmatpush.msra.mxu0 0.0
  %118 = vmatpush.msra.mxu0 0.0
  %119 = vmatpush.msra.mxu0 %v98
  %120 = vmatpush.msra.mxu0 %v97
  %121 = vmatpush.msra.mxu0 %v96
  %122 = vmatpush.msra.mxu0 %v95
  %123 = vmatmul.f32.gmra.mxu0 %v105
  %v124 = vpop.f32.mrf.mxu0
  %v125 = vadd.f32 %v101, %v124
  %126 = vdwg.mxu0
  %vm127 = vcmask 23552
  %128 = vst.msk [vmem:[%s7] sm:$0xff] %vm127, %v125
  // Predicated region
  $region30: #{simple_rotation_predictor.1} parent=0 // pred_check
    _
  $region31: #{simple_rotation_predictor.1} parent=0 // pred_check_branch
    %130 = sbr.rel (0) target = $region33
  $region32: #{simple_rotation_predictor.1} parent=0 // pred_region
    _
  $region33: #{simple_rotation_predictor.1} parent=0 // pred_fallthru
    _
  // Predicated region
  $region34: #{simple_rotation_predictor.1} parent=0 // pred_check
    _
  $region35: #{simple_rotation_predictor.1} parent=0 // pred_check_branch
    %132 = sbr.rel (0) target = $region37
  $region36: #{simple_rotation_predictor.1} parent=0 // pred_region
    _
  $region37: #{simple_rotation_predictor.1} parent=0 // pred_fallthru
    _

</llo_original>
